<compile_context>
chip_gen: v5e
topology: v5e:2x2
jax: 0.10.0
libtpu: 0.0.40
codegen_flags: <defaults>
</compile_context>

<pallas_src>
from functools import partial

import jax
import jax.numpy as jnp
from jax.experimental import pallas as pl
from jax.experimental.pallas import tpu as pltpu


def _prenorm_kernel(x_ref, g_ref, b_ref, o_ref, *, inv_n: float, eps: float):
    # x_ref block: (1, 1, cpg, HWp); g_ref/b_ref: (1, cpg, 1) f32.
    x = x_ref[0, 0]                                      # (cpg, HWp), native dtype

    # Single-pass stats with f32 accumulation; zero-padded lanes add 0.
    s1 = jnp.sum(x, dtype=jnp.float32)
    s2 = jnp.sum(jnp.square(x.astype(jnp.float32)))
    mean = s1 * inv_n
    var = s2 * inv_n - mean * mean
    rstd = jax.lax.rsqrt(var + eps)

    # Fold affine: y = x * scale + shift.
    scale = g_ref[0] * rstd                              # (cpg, 1) f32
    shift = b_ref[0] - mean * scale                      # (cpg, 1) f32

    # act_fn = Identity, fn = Identity (see TODO above).
    o_ref[0, 0] = (x * scale + shift).astype(o_ref.dtype)


def prenorm(x, gamma, beta, *, groups: int = 1, eps: float = 1e-5):
    """GroupNorm(groups, C) + Identity act + Identity fn.  x: (N, C, H, W)."""
    N, C, H, W = x.shape
    assert C % groups == 0
    cpg = C // groups
    HW = H * W
    HWp = ((HW + 127) // 128) * 128                      # lane-dense last dim

    xr = x.reshape(N, groups, cpg, HW)
    if HWp != HW:
        xr = jnp.pad(xr, ((0, 0), (0, 0), (0, 0), (0, HWp - HW)))

    g = gamma.reshape(groups, cpg, 1).astype(jnp.float32)
    b = beta.reshape(groups, cpg, 1).astype(jnp.float32)

    # VMEM budget: double-buffered in + out blocks, f32 temporaries, params.
    itemsize = x.dtype.itemsize
    blk = cpg * HWp
    needed = 4 * blk * itemsize + 2 * blk * 4 + 4 * C * 4 + (1 << 20)
    vmem_limit = int(min(max(needed, 32 << 20), 64 << 20))  # v7x-safe ceiling

    out = pl.pallas_call(
        partial(_prenorm_kernel, inv_n=1.0 / float(cpg * HW), eps=eps),
        out_shape=jax.ShapeDtypeStruct((N, groups, cpg, HWp), x.dtype),
        grid=(N, groups),
        in_specs=[
            pl.BlockSpec((1, 1, cpg, HWp), lambda n, gi: (n, gi, 0, 0)),
            pl.BlockSpec((1, cpg, 1), lambda n, gi: (gi, 0, 0)),
            pl.BlockSpec((1, cpg, 1), lambda n, gi: (gi, 0, 0)),
        ],
        out_specs=pl.BlockSpec((1, 1, cpg, HWp), lambda n, gi: (n, gi, 0, 0)),
        compiler_params=pltpu.CompilerParams(
            dimension_semantics=("parallel", "parallel"),
            vmem_limit_bytes=vmem_limit,
        ),
    )(xr, g, b)

    out = out[..., :HW].reshape(N, C, H, W)
    return out


def prenorm_ref(x, gamma, beta, *, groups: int = 1, eps: float = 1e-5):
    """Pure-JAX reference (matches torch.nn.GroupNorm semantics)."""
    N, C, H, W = x.shape
    xg = x.reshape(N, groups, C // groups, H, W).astype(jnp.float32)
    mean = xg.mean(axis=(2, 3, 4), keepdims=True)
    var = ((xg - mean) ** 2).mean(axis=(2, 3, 4), keepdims=True)
    xn = ((xg - mean) * jax.lax.rsqrt(var + eps)).reshape(N, C, H, W)
    return (xn * gamma[None, :, None, None] + beta[None, :, None, None]).astype(x.dtype)


def _run_case(key, shape, groups):
    kx, kg, kb = jax.random.split(key, 3)
    N, C, H, W = shape
    x = jax.random.normal(kx, (N, C, H, W), dtype=jnp.float32)
    gamma = 1.0 + 0.1 * jax.random.normal(kg, (C,), dtype=jnp.float32)
    beta = 0.1 * jax.random.normal(kb, (C,), dtype=jnp.float32)

    y = jax.block_until_ready(prenorm(x, gamma, beta, groups=groups))
    y_ref = prenorm_ref(x, gamma, beta, groups=groups)
    assert y.shape == (N, C, H, W)
    assert jnp.allclose(y, y_ref, atol=1e-4, rtol=1e-4), (
        f"mismatch vs reference for shape={shape} groups={groups}")


if __name__ == "__main__":
    key = jax.random.PRNGKey(0)
    k1, k2 = jax.random.split(key)

    # Module-default config (groups=1), HW already lane-dense (16*16=256).
    _run_case(k1, (2, 4, 16, 16), groups=1)
    # Multi-group + non-multiple-of-128 HW (7*7=49) exercises the group-split
    # grid and the zero-pad/masked-stats path.
    _run_case(k2, (2, 8, 7, 7), groups=4)

    print("KERNEL_OK")
</pallas_src>

<mosaic_0001>
module attributes {stable_mosaic.version = 11 : i64} {
  func.func @_prenorm_kernel(%arg0: i32, %arg1: i32, %arg2: memref<1x1x4x256xf32, #tpu.memory_space<vmem>>, %arg3: memref<1x4x1xf32, #tpu.memory_space<vmem>>, %arg4: memref<1x4x1xf32, #tpu.memory_space<vmem>>, %arg5: memref<1x1x4x256xf32, #tpu.memory_space<vmem>>) attributes {dimension_semantics = [#tpu.dimension_semantics<parallel>, #tpu.dimension_semantics<parallel>], iteration_bounds = array<i64: 2, 1>, scalar_prefetch = 0 : i64, scratch_operands = 0 : i64, tpu.core_type = #tpu.core_type<tc>, window_params = [{transform_indices = @transform_0, window_bounds = array<i64: 1, 1, 4, 256>}, {transform_indices = @transform_1, window_bounds = array<i64: 1, 4, 1>}, {transform_indices = @transform_2, window_bounds = array<i64: 1, 4, 1>}, {transform_indices = @transform_3, window_bounds = array<i64: 1, 1, 4, 256>}]} {
    %c0 = arith.constant 0 : index
    %c0_0 = arith.constant 0 : index
    %c0_1 = arith.constant 0 : index
    %c0_2 = arith.constant 0 : index
    %0 = vector.load %arg2[%c0, %c0_0, %c0_1, %c0_2] : memref<1x1x4x256xf32, #tpu.memory_space<vmem>>, vector<1x1x4x256xf32>
    %1 = vector.shape_cast %0 : vector<1x1x4x256xf32> to vector<4x256xf32>
    %2 = vector.shape_cast %1 : vector<4x256xf32> to vector<1x4x256xf32>
    %cst = arith.constant dense<0.000000e+00> : vector<1xf32>
    %3 = vector.multi_reduction <add>, %2, %cst [1, 2] : vector<1x4x256xf32> to vector<1xf32>
    %4 = vector.shape_cast %3 : vector<1xf32> to vector<1x1x1xf32>
    %5 = vector.extract %4[0, 0, 0] : f32 from vector<1x1x1xf32>
    %6 = arith.mulf %1, %1 : vector<4x256xf32>
    %7 = vector.shape_cast %6 : vector<4x256xf32> to vector<1x4x256xf32>
    %cst_3 = arith.constant dense<0.000000e+00> : vector<1xf32>
    %8 = vector.multi_reduction <add>, %7, %cst_3 [1, 2] : vector<1x4x256xf32> to vector<1xf32>
    %9 = vector.shape_cast %8 : vector<1xf32> to vector<1x1x1xf32>
    %10 = vector.extract %9[0, 0, 0] : f32 from vector<1x1x1xf32>
    %cst_4 = arith.constant 9.765625E-4 : f32
    %11 = arith.mulf %5, %cst_4 : f32
    %cst_5 = arith.constant 9.765625E-4 : f32
    %12 = arith.mulf %10, %cst_5 : f32
    %13 = arith.mulf %11, %11 : f32
    %14 = arith.subf %12, %13 : f32
    %cst_6 = arith.constant 9.99999974E-6 : f32
    %15 = arith.addf %14, %cst_6 : f32
    %16 = math.rsqrt %15 : f32
    %c0_7 = arith.constant 0 : index
    %c0_8 = arith.constant 0 : index
    %c0_9 = arith.constant 0 : index
    %17 = vector.load %arg3[%c0_7, %c0_8, %c0_9] : memref<1x4x1xf32, #tpu.memory_space<vmem>>, vector<1x4x1xf32>
    %18 = vector.shape_cast %17 : vector<1x4x1xf32> to vector<4x1xf32>
    %19 = vector.broadcast %16 : f32 to vector<4x1xf32>
    %20 = arith.mulf %18, %19 : vector<4x1xf32>
    %c0_10 = arith.constant 0 : index
    %c0_11 = arith.constant 0 : index
    %c0_12 = arith.constant 0 : index
    %21 = vector.load %arg4[%c0_10, %c0_11, %c0_12] : memref<1x4x1xf32, #tpu.memory_space<vmem>>, vector<1x4x1xf32>
    %22 = vector.shape_cast %21 : vector<1x4x1xf32> to vector<4x1xf32>
    %23 = vector.broadcast %11 : f32 to vector<4x1xf32>
    %24 = arith.mulf %23, %20 : vector<4x1xf32>
    %25 = arith.subf %22, %24 : vector<4x1xf32>
    %26 = vector.broadcast %20 : vector<4x1xf32> to vector<4x256xf32>
    %27 = arith.mulf %1, %26 : vector<4x256xf32>
    %28 = vector.broadcast %25 : vector<4x1xf32> to vector<4x256xf32>
    %29 = arith.addf %27, %28 : vector<4x256xf32>
    %c0_13 = arith.constant 0 : index
    %c0_14 = arith.constant 0 : index
    %c0_15 = arith.constant 0 : index
    %c0_16 = arith.constant 0 : index
    %30 = vector.load %arg5[%c0_13, %c0_14, %c0_15, %c0_16] : memref<1x1x4x256xf32, #tpu.memory_space<vmem>>, vector<1x1x4x256xf32>
    %31 = vector.shape_cast %30 : vector<1x1x4x256xf32> to vector<4x256xf32>
    %32 = vector.shape_cast %29 : vector<4x256xf32> to vector<1x1x4x256xf32>
    tpu.vector_store %arg5[%c0_13, %c0_14, %c0_15, %c0_16], %32 {strides = array<i32>} : memref<1x1x4x256xf32, #tpu.memory_space<vmem>>, vector<1x1x4x256xf32>,
    return
  }
  func.func @transform_0(%arg0: i32, %arg1: i32) -> (i32, i32, i32, i32) {
    %c0_i32 = arith.constant 0 : i32
    %c0_i32_0 = arith.constant 0 : i32
    %c0_i32_1 = arith.constant 0 : i32
    return %arg0, %arg1, %c0_i32, %c0_i32_0 : i32, i32, i32, i32
  }
  func.func @transform_1(%arg0: i32, %arg1: i32) -> (i32, i32, i32) {
    %c0_i32 = arith.constant 0 : i32
    %c0_i32_0 = arith.constant 0 : i32
    %c0_i32_1 = arith.constant 0 : i32
    return %arg1, %c0_i32, %c0_i32_0 : i32, i32, i32
  }
  func.func @transform_2(%arg0: i32, %arg1: i32) -> (i32, i32, i32) {
    %c0_i32 = arith.constant 0 : i32
    %c0_i32_0 = arith.constant 0 : i32
    %c0_i32_1 = arith.constant 0 : i32
    return %arg1, %c0_i32, %c0_i32_0 : i32, i32, i32
  }
  func.func @transform_3(%arg0: i32, %arg1: i32) -> (i32, i32, i32, i32) {
    %c0_i32 = arith.constant 0 : i32
    %c0_i32_0 = arith.constant 0 : i32
    %c0_i32_1 = arith.constant 0 : i32
    return %arg0, %arg1, %c0_i32, %c0_i32_0 : i32, i32, i32, i32
  }
}

</mosaic_0001>

<llo_original>
// kernel: tpu_custom_call.1
$region0: #{tpu_custom_call.1}
  #allocation0 [shape = 'u32[]', space=smem, size = 0x4, offset = 0x4, fixed_abs, tag = 'smem constant byte address 0x4 - core index']
  #allocation1 [shape = 'u32[72,128]{1,0:T(1,128)}', space=vmem, size = 0x9000, scoped, tag = 'internal scratch']
  %s0 = inlined_call_operand.hbm [shape: f32[2,1,4,256], index: 0, kind: input, shape index: {}]
  %s1 = inlined_call_operand.vmem [shape: f32[1,4,1], index: 1, kind: input, shape index: {}]
  %s2 = inlined_call_operand.vmem [shape: f32[1,4,1], index: 2, kind: input, shape index: {}]
  %s3 = inlined_call_operand.hbm [shape: f32[2,1,4,256], index: 3, kind: output, shape index: {}]
  %s4 = sld [smem:[#allocation0]]
  $region49: #{tpu_custom_call.1} parent=0
    _
  %s6 = ssub.s32 1, %s4
  %s7 = scalar_select 0, %s6, %s4
  $region1: #{tpu_custom_call.1} parent=0
    #allocation2 [shape = 'u8[8192]{0}', space=vmem, size = 0x2000, scoped, tag = 'input window, operand 0']
    #allocation3 [shape = 's32[2]{0}', space=sflag, size = 0x8, scoped, tag = 'scoped memory for tpu_custom_call.1']
    #allocation4 [shape = 's32[2]{0}', space=sflag, size = 0x8, scoped, tag = 'scoped memory for tpu_custom_call.1']
    #allocation5 [shape = 'u8[8192]{0}', space=vmem, size = 0x2000, scoped, tag = 'output window, operand 0']
    %8 = vsyncpa [#allocation3], 0
    %s9 = scalar_lea.sflag [#allocation3], 1
    %10 = vsyncpa %s9, 0
    %11 = vsyncpa [#allocation4], 0
    %s12 = scalar_lea.sflag [#allocation4], 1
    %13 = vsyncpa %s12, 0
    loop: start=0, step=1, limit=4
    $region2: #{tpu_custom_call.1} parent=1 // loop_pre_header
      _
    $region3: #{tpu_custom_call.1} parent=1 // loop_header
      %s15 = sphi 0, %s19
      %p16 = scmp.ge.s32.totalorder %s15, 4
      %s22 = sphi 0, %s34
      %s23 = sphi 0, %s30
      %s24 = sphi 0, %s22
      %s25 = sphi 0, %s23
      %s26 = sphi 0, %s24
      %s27 = sphi 0, %s25
      %s39 = sphi 0, %s41
      %s42 = sphi 0, %s39
      %s43 = sphi 0, %s42
      %s59 = sphi 0, %s43
      %s65 = sphi 0, %s67
      %s68 = sphi 0, %s65
      %s69 = sphi 0, %s68
      %s85 = sphi 0, %s69
      %s91 = sphi 0, %s93
      %s94 = sphi 0, %s91
      %s95 = sphi 0, %s94
      %s111 = sphi 0, %s95
      %s119 = sphi 0, %s121
      %s122 = sphi 0, %s119
      %s123 = sphi 0, %s122
      %s139 = sphi 0, %s123
    $region4: #{tpu_custom_call.1} parent=1 // loop_header_branch
      %18 = sbr.rel (%p16) target = $region8
    $region5: #{tpu_custom_call.1} parent=1 // loop_body
      %s20 = ssub.s32 %s15, 1
      %s21 = ssub.s32 %s15, 2
      %s28 = sadd.s32 1, %s23
      %p29 = scmp.ge.s32.totalorder %s28, 1
      %s30 = scalar_select %p29, 0, %s28
      %s31 = sadd.s32 1, %s22
      %s32 = scalar_select %p29, %s31, %s22
      %p33 = scmp.ge.s32.totalorder %s32, 2
      %s34 = scalar_select %p33, 0, %s32
      %s35 = ssub.s32 %s22, %s34
      %s36 = ssub.s32 %s23, %s30
      %s37 = sor.u32 %s35, %s36
      %p38 = scmp.eq.s32.totalorder %s37, 0
      %s40 = sadd.s32 %s39, 1
      %s41 = scalar_select %p38, %s39, %s40
      %p44 = pneg %p38
      %p45 = scmp.eq.s32.totalorder %s15, 1
      %p46 = por %p44, %p45
      %p47 = scmp.ne.s32.totalorder %s39, %s42
      %p48 = scmp.eq.s32.totalorder %s15, 0
      %p49 = por %p47, %p48
      %p50 = scmp.ne.s32.totalorder %s39, %s42
      %p51 = scmp.eq.s32.totalorder %s20, 1
      %p52 = por %p50, %p51
      %p53 = scmp.ne.s32.totalorder %s42, %s43
      %p54 = scmp.eq.s32.totalorder %s20, 0
      %p55 = por %p53, %p54
      %p56 = scmp.ne.s32.totalorder %s42, %s43
      %p57 = scmp.eq.s32.totalorder %s21, 1
      %p58 = por %p56, %p57
      %p60 = scmp.ne.s32.totalorder %s43, %s59
      %p61 = scmp.eq.s32.totalorder %s21, 0
      %p62 = por %p60, %p61
      %s63 = ssub.s32 %s23, %s30
      %p64 = scmp.eq.s32.totalorder %s63, 0
      %s66 = sadd.s32 %s65, 1
      %s67 = scalar_select %p64, %s65, %s66
      %p70 = pneg %p64
      %p71 = scmp.eq.s32.totalorder %s15, 1
      %p72 = por %p70, %p71
      %p73 = scmp.ne.s32.totalorder %s65, %s68
      %p74 = scmp.eq.s32.totalorder %s15, 0
      %p75 = por %p73, %p74
      %p76 = scmp.ne.s32.totalorder %s65, %s68
      %p77 = scmp.eq.s32.totalorder %s20, 1
      %p78 = por %p76, %p77
      %p79 = scmp.ne.s32.totalorder %s68, %s69
      %p80 = scmp.eq.s32.totalorder %s20, 0
      %p81 = por %p79, %p80
      %p82 = scmp.ne.s32.totalorder %s68, %s69
      %p83 = scmp.eq.s32.totalorder %s21, 1
      %p84 = por %p82, %p83
      %p86 = scmp.ne.s32.totalorder %s69, %s85
      %p87 = scmp.eq.s32.totalorder %s21, 0
      %p88 = por %p86, %p87
      %s89 = ssub.s32 %s23, %s30
      %p90 = scmp.eq.s32.totalorder %s89, 0
      %s92 = sadd.s32 %s91, 1
      %s93 = scalar_select %p90, %s91, %s92
      %p96 = pneg %p90
      %p97 = scmp.eq.s32.totalorder %s15, 1
      %p98 = por %p96, %p97
      %p99 = scmp.ne.s32.totalorder %s91, %s94
      %p100 = scmp.eq.s32.totalorder %s15, 0
      %p101 = por %p99, %p100
      %p102 = scmp.ne.s32.totalorder %s91, %s94
      %p103 = scmp.eq.s32.totalorder %s20, 1
      %p104 = por %p102, %p103
      %p105 = scmp.ne.s32.totalorder %s94, %s95
      %p106 = scmp.eq.s32.totalorder %s20, 0
      %p107 = por %p105, %p106
      %p108 = scmp.ne.s32.totalorder %s94, %s95
      %p109 = scmp.eq.s32.totalorder %s21, 1
      %p110 = por %p108, %p109
      %p112 = scmp.ne.s32.totalorder %s95, %s111
      %p113 = scmp.eq.s32.totalorder %s21, 0
      %p114 = por %p112, %p113
      %s115 = ssub.s32 %s22, %s34
      %s116 = ssub.s32 %s23, %s30
      %s117 = sor.u32 %s115, %s116
      %p118 = scmp.eq.s32.totalorder %s117, 0
      %s120 = sadd.s32 %s119, 1
      %s121 = scalar_select %p118, %s119, %s120
      %p124 = pneg %p118
      %p125 = scmp.eq.s32.totalorder %s15, 1
      %p126 = por %p124, %p125
      %p127 = scmp.ne.s32.totalorder %s119, %s122
      %p128 = scmp.eq.s32.totalorder %s15, 0
      %p129 = por %p127, %p128
      %p130 = scmp.ne.s32.totalorder %s119, %s122
      %p131 = scmp.eq.s32.totalorder %s20, 1
      %p132 = por %p130, %p131
      %p133 = scmp.ne.s32.totalorder %s122, %s123
      %p134 = scmp.eq.s32.totalorder %s20, 0
      %p135 = por %p133, %p134
      %p136 = scmp.ne.s32.totalorder %s122, %s123
      %p137 = scmp.eq.s32.totalorder %s21, 1
      %p138 = por %p136, %p137
      %p140 = scmp.ne.s32.totalorder %s123, %s139
      %p141 = scmp.eq.s32.totalorder %s21, 0
      %p142 = por %p140, %p141
      %p143 = scmp.le.s32.totalorder 1, %s15
      %p144 = scmp.lt.s32.totalorder %s15, 3
      %p145 = pnand %p143, %p144
      %p146 = pneg %p145
      // Predicated region
      $region9: #{tpu_custom_call.1} parent=5 // pred_check
        _
      $region10: #{tpu_custom_call.1} parent=5 // pred_check_branch
        %148 = sbr.rel (%p145) target = $region12
      $region11: #{tpu_custom_call.1} parent=5 // pred_region
        %s149 = ssub.s32 %s15, 1
        // Predicated region
        $region13: #{tpu_custom_call.1} parent=11 // pred_check
          %p150 = pneg %p81
        $region14: #{tpu_custom_call.1} parent=11 // pred_check_branch
          %152 = sbr.rel (%p150) target = $region16
        $region15: #{tpu_custom_call.1} parent=11 // pred_region
          %p153 = scmp.lt.s32.totalorder %s25, 0
          %s154 = scalar_select %p153, %s25, 0
          %s155 = smul.addr %s154, 4
          %s156 = scalar_lea.vmem %s1, %s155
        $region16: #{tpu_custom_call.1} parent=11 // pred_fallthru
          _
        // Predicated region
        $region17: #{tpu_custom_call.1} parent=11 // pred_check
          %p157 = pneg %p107
        $region18: #{tpu_custom_call.1} parent=11 // pred_check_branch
          %159 = sbr.rel (%p157) target = $region20
        $region19: #{tpu_custom_call.1} parent=11 // pred_region
          %p160 = scmp.lt.s32.totalorder %s25, 0
          %s161 = scalar_select %p160, %s25, 0
          %s162 = smul.addr %s161, 4
          %s163 = scalar_lea.vmem %s2, %s162
        $region20: #{tpu_custom_call.1} parent=11 // pred_fallthru
          _
      $region12: #{tpu_custom_call.1} parent=5 // pred_fallthru
        _
      %p164 = scmp.lt.s32.totalorder %s15, 2
      // Predicated region
      $region21: #{tpu_custom_call.1} parent=5 // pred_check
        %p165 = pneg %p164
      $region22: #{tpu_custom_call.1} parent=5 // pred_check_branch
        %167 = sbr.rel (%p165) target = $region24
      $region23: #{tpu_custom_call.1} parent=5 // pred_region
        // Predicated region
        $region25: #{tpu_custom_call.1} parent=23 // pred_check
          %p168 = pneg %p49
        $region26: #{tpu_custom_call.1} parent=23 // pred_check_branch
          %170 = sbr.rel (%p168) target = $region28
        $region27: #{tpu_custom_call.1} parent=23 // pred_region
          %s171 = sand.u32 %s39, 1
          %s172 = scalar_lea.sflag [#allocation3], %s171
          %s173 = sand.u32 %s39, 1
          %s174 = smul.addr %s173, 8
          %s175 = scalar_lea.vmem [#allocation2], %s174
          %177 = vsyncadd %s172, 0
          %s178 = smul.addr %s23, 2
          %s179 = smul.addr %s22, 2
          %s180 = sadd.s32 %s178, %s179
          %s181 = smul.addr %s180, 4
          %s182 = scalar_lea.hbm %s0, %s181
          %s184 = sshll.u32 %s182, 4
          %s185 = int_to_ptr.hbm [resolvable:$true] %s184
          %s186 = sshll.u32 %s175, 4
          %s187 = int_to_ptr.vmem [resolvable:$true] %s186
          %189 = dma.hbm_to_vmem [thread:$0]  %s185, 128, %s187, %s172
        $region28: #{tpu_custom_call.1} parent=23 // pred_fallthru
          _
      $region24: #{tpu_custom_call.1} parent=5 // pred_fallthru
        _
      %p190 = scmp.le.s32.totalorder 1, %s15
      %p191 = scmp.lt.s32.totalorder %s15, 3
      %p192 = pnand %p190, %p191
      %p193 = pneg %p192
      // Predicated region
      $region29: #{tpu_custom_call.1} parent=5 // pred_check
        _
      $region30: #{tpu_custom_call.1} parent=5 // pred_check_branch
        %195 = sbr.rel (%p192) target = $region32
      $region31: #{tpu_custom_call.1} parent=5 // pred_region
        %s196 = ssub.s32 %s15, 1
        %s197 = sand.u32 %s42, 1
        %s198 = scalar_lea.sflag [#allocation3], %s197
        %s199 = sand.u32 %s42, 1
        %s200 = smul.addr %s199, 8
        %s201 = scalar_lea.vmem [#allocation2], %s200
        // Predicated region
        $region33: #{tpu_custom_call.1} parent=31 // pred_check
          %p202 = pneg %p55
        $region34: #{tpu_custom_call.1} parent=31 // pred_check_branch
          %204 = sbr.rel (%p202) target = $region36
        $region35: #{tpu_custom_call.1} parent=31 // pred_region
          %206 = dma.done %s198, 128
        $region36: #{tpu_custom_call.1} parent=31 // pred_fallthru
          _
        %s207 = sand.u32 %s42, 1
        %s208 = scalar_lea.sflag [#allocation3], %s207
        %s209 = sand.u32 %s42, 1
        %s210 = smul.addr %s209, 8
        %s211 = scalar_lea.vmem [#allocation2], %s210
        %p212 = pneg %p55
        %p213 = pneg %p52
        %p214 = scmp.lt.s32.totalorder %s25, 0
        %s215 = scalar_select %p214, %s25, 0
        %s216 = smul.addr %s215, 4
        %s217 = scalar_lea.vmem %s1, %s216
        %p218 = pneg %p81
        %p219 = pneg %p78
        %p220 = scmp.lt.s32.totalorder %s25, 0
        %s221 = scalar_select %p220, %s25, 0
        %s222 = smul.addr %s221, 4
        %s223 = scalar_lea.vmem %s2, %s222
        %p224 = pneg %p107
        %p225 = pneg %p104
        %p226 = pneg %p135
        %p227 = pneg %p132
        %s228 = sand.u32 %s122, 1
        %s229 = scalar_lea.sflag [#allocation4], %s228
        %s230 = sand.u32 %s122, 1
        %s231 = smul.addr %s230, 8
        %s232 = scalar_lea.vmem [#allocation5], %s231
        %p233 = scmp.lt.s32.totalorder %s25, 0
        %s234 = scalar_select %p233, %s25, 0
        %s235 = smul.addr %s234, 4
        %s236 = scalar_lea.vmem %s1, %s235
        %p237 = scmp.lt.s32.totalorder %s25, 0
        %s238 = scalar_select %p237, %s25, 0
        %s239 = smul.addr %s238, 4
        %s240 = scalar_lea.vmem %s2, %s239
        %v241 = vld [vmem:[%s201] sm:$0xff]
        %243 = vst [vmem:[#allocation1] ss:$2 sm:$0xff] %v241
        %v244 = vld.sshfl [vmem:[#allocation1] sm:$0xff pattern:$0x75316420]
        %v245 = vld.sshfl [vmem:[#allocation1 + $0x8] sm:$0xff pattern:$0x75316420]
        %vm248 = vcmask 1043456
        %v249 = vsel %vm248, %v244, 0.0
        %v250 = vsel %vm248, %v245, 0.0
        %v251 = vadd.f32 %v249, %v250
        %252 = vadd.xlane.f32.xlu0 %v251
        %v253 = vpop.xlane.xlu0 %252
        %v254 = vrot.slane %v253, 4
        %v255 = vadd.f32 %v253, %v254
        %v256 = vrot.slane %v255, 2
        %v257 = vadd.f32 %v255, %v256
        %v258 = vrot.slane %v257, 1
        %v259 = vadd.f32 %v257, %v258
        %s260 = vtos %v259
        %v261 = vmul.f32 %v241, %v241
        %263 = vst [vmem:[#allocation1] ss:$2 sm:$0xff] %v261
        %v264 = vld.sshfl [vmem:[#allocation1] sm:$0xff pattern:$0x75316420]
        %v265 = vld.sshfl [vmem:[#allocation1 + $0x8] sm:$0xff pattern:$0x75316420]
        %v268 = vsel %vm248, %v264, 0.0
        %v269 = vsel %vm248, %v265, 0.0
        %v270 = vadd.f32 %v268, %v269
        %271 = vadd.xlane.f32.xlu0 %v270
        %v272 = vpop.xlane.xlu0 %271
        %v273 = vrot.slane %v272, 4
        %v274 = vadd.f32 %v272, %v273
        %v275 = vrot.slane %v274, 2
        %v276 = vadd.f32 %v274, %v275
        %v277 = vrot.slane %v276, 1
        %v278 = vadd.f32 %v276, %v277
        %s279 = vtos %v278
        %s280 = smul.f32 %s260, 0.0009765625
        %s281 = smul.f32 %s279, 0.0009765625
        %s282 = smul.f32 %s280, %s280
        %s283 = ssub.f32 %s281, %s282
        %s284 = sadd.f32 %s283, 1e-05
        %v285 = vstv %s284
        %v286 = vrsqrt.pop %v285
        %v287 = vmul.f32 %v286, %v285
        %v288 = vmul.f32 %v287, %v286
        %v289 = vmul.f32 0.5, %v288
        %v290 = vsub.f32 1.5, %v289
        %v291 = vmul.f32 %v286, %v290
        %vm292 = vweird.f32 %v285
        %vm293 = vweird.f32 %v286
        %vm294 = vmor %vm292, %vm293
        %v295 = vsel %vm294, %v286, %v291
        %s296 = vtos %v295
        %v297 = vld [vmem:[%s236] sm:$0xf]
        %v298 = vstv %s296
        %v299 = vmul.f32 %v297, %v298
        %v300 = vld [vmem:[%s240] sm:$0xf]
        %v301 = vstv %s280
        %v302 = vmul.f32 %v301, %v299
        %v303 = vsub.f32 %v300, %v302
        %305 = vset.pattern.permute.xlu0 0
        %306 = vperm.xlu0 %305, %v299
        %v307 = vpop.permute.xlu0 %306
        %v309 = vunpack.c.l.s4 839922192
        %v310 = vunpack.c.0.s8 %v309
        %v311 = vperm.slane %v307, %v310
        %v313 = vmul.f32 %v241, %v311
        %315 = vset.pattern.permute.xlu0 0
        %316 = vperm.xlu0 %315, %v303
        %v317 = vpop.permute.xlu0 %316
        %v319 = vunpack.c.l.s4 839922192
        %v320 = vunpack.c.0.s8 %v319
        %v321 = vperm.slane %v317, %v320
        %v323 = vadd.f32 %v313, %v321
        %324 = vst [vmem:[%s232] sm:$0xff] %v323
        %s325 = sand.u32 %s122, 1
        %s326 = scalar_lea.sflag [#allocation4], %s325
        %s327 = sand.u32 %s122, 1
        %s328 = smul.addr %s327, 8
        %s329 = scalar_lea.vmem [#allocation5], %s328
        // Predicated region
        $region37: #{tpu_custom_call.1} parent=31 // pred_check
          %p330 = pneg %p132
        $region38: #{tpu_custom_call.1} parent=31 // pred_check_branch
          %332 = sbr.rel (%p330) target = $region40
        $region39: #{tpu_custom_call.1} parent=31 // pred_region
          %334 = vsyncadd %s326, 0
          %s335 = smul.addr %s25, 2
          %s336 = smul.addr %s24, 2
          %s337 = sadd.s32 %s335, %s336
          %s338 = smul.addr %s337, 4
          %s339 = scalar_lea.hbm %s3, %s338
          %s341 = sshll.u32 %s329, 4
          %s342 = int_to_ptr.vmem [resolvable:$true] %s341
          %s343 = sshll.u32 %s339, 4
          %s344 = int_to_ptr.hbm [resolvable:$true] %s343
          %346 = dma.vmem_to_hbm [thread:$0]  %s342, 128, %s344, %s326
        $region40: #{tpu_custom_call.1} parent=31 // pred_fallthru
          _
      $region32: #{tpu_custom_call.1} parent=5 // pred_fallthru
        _
      %p347 = scmp.le.s32.totalorder 2, %s15
      // Predicated region
      $region41: #{tpu_custom_call.1} parent=5 // pred_check
        %p348 = pneg %p347
      $region42: #{tpu_custom_call.1} parent=5 // pred_check_branch
        %350 = sbr.rel (%p348) target = $region44
      $region43: #{tpu_custom_call.1} parent=5 // pred_region
        %s351 = ssub.s32 %s15, 2
        // Predicated region
        $region45: #{tpu_custom_call.1} parent=43 // pred_check
          %p352 = pneg %p138
        $region46: #{tpu_custom_call.1} parent=43 // pred_check_branch
          %354 = sbr.rel (%p352) target = $region48
        $region47: #{tpu_custom_call.1} parent=43 // pred_region
          %s355 = sand.u32 %s123, 1
          %s356 = scalar_lea.sflag [#allocation4], %s355
          %s357 = sand.u32 %s123, 1
          %s358 = smul.addr %s357, 8
          %s359 = scalar_lea.vmem [#allocation5], %s358
          %361 = dma.done %s356, 128
        $region48: #{tpu_custom_call.1} parent=43 // pred_fallthru
          _
      $region44: #{tpu_custom_call.1} parent=5 // pred_fallthru
        _
    $region6: #{tpu_custom_call.1} parent=1 // loop_footer
      %s19 = sadd.s32 1, %s15
    $region7: #{tpu_custom_call.1} parent=1 // loop_footer_branch
      %14 = sbr.rel target = $region3
    $region8: #{tpu_custom_call.1} parent=1 // loop_exit
      _
    %362 = vsyncpa [#allocation3], 1
    %s363 = scalar_lea.sflag [#allocation3], 1
    %364 = vsyncpa %s363, 1
    %365 = vsyncpa [#allocation4], 1
    %s366 = scalar_lea.sflag [#allocation4], 1
    %367 = vsyncpa %s366, 1

</llo_original>
